<compile_context>
chip_gen: v7x
topology: tpu7x:2x2x1
jax: 0.10.0
libtpu: 0.0.40
codegen_flags: <defaults>
</compile_context>

<pallas_src>
import jax
import jax.numpy as jnp
from jax.experimental import pallas as pl
from jax.experimental.pallas import tpu as pltpu

LANES = 128


def combined_detector_kernel(x_ref, wf_ref, b_ref, w2_ref, thr_ref, out_ref):
    """Fused detector + main-model forward for one row tile.

    x_ref  : (TB, D)     f32   flattened inputs (cast to bf16 in-kernel)
    wf_ref : (D, H1+1)   bf16  cols 0..H1-1 = main W1, col H1 = wd[:,1]-wd[:,0]
    b_ref  : (2, >=128)  f32   row0[:H1] = b1, row1[:NC] = b2
    w2_ref : (H1, NC)    bf16  main-model second layer
    thr_ref: (1, 1)      f32   SMEM scalar = -(bd1 - bd0)  (decision threshold)
    out_ref: (TB, NC)    f32   zeros on adversarial rows (argmax != 1)
    """
    h1 = w2_ref.shape[0]
    nc = out_ref.shape[1]

    # One MXU pass over the D contraction computes the main-model hidden layer
    # AND the detector decision margin (extra column h1).  bf16 cast happens
    # here on the VPU so HBM only ever streams x once, as f32.
    x = x_ref[...].astype(jnp.bfloat16)
    y = jnp.dot(x, wf_ref[...], preferred_element_type=jnp.float32)   # (TB, H1+1)

    # Lane-aligned bias add + ReLU for the hidden layer (f32, VPU).
    h = jnp.maximum(y[:, :h1] + b_ref[0:1, :h1], 0.0)

    # argmax over 2 classes: pred==1  <=>  det1 > det0  <=>
    #   x @ (wd1-wd0) > -(bd1-bd0); ties -> class 0 (matches torch argmax).
    clean = y[:, h1:h1 + 1] > thr_ref[0, 0]                           # (TB, 1)

    # Main-model layer 2 (narrow NC-wide MXU output) + bias.
    main = jnp.dot(h.astype(jnp.bfloat16), w2_ref[...],
                   preferred_element_type=jnp.float32)
    main = main + b_ref[1:2, :nc]

    # Non-clean rows stay exactly zero (torch.zeros_like semantics).
    out_ref[...] = jnp.where(clean, main, 0.0)


def _prepare_params(params):
    """Fuse / bf16-cast the module parameters (plain-JAX glue, tiny arrays)."""
    wd, bd, w1, b1, w2, b2 = params
    D, NC = wd.shape
    H1 = w1.shape[1]
    assert NC == 2, "detector is a binary (adversarial / clean) head"

    # Fused first-layer weight: main W1 plus one detector-difference column.
    wf = jnp.concatenate(
        [w1, (wd[:, 1] - wd[:, 0])[:, None]], axis=1).astype(jnp.bfloat16)  # (D, H1+1)

    w2b = w2.astype(jnp.bfloat16)                                           # (H1, NC)

    # b1 and b2 packed into one small lane-aligned f32 block (one DMA).
    bw = ((max(H1, NC) + LANES - 1) // LANES) * LANES
    b_all = jnp.zeros((2, bw), jnp.float32)
    b_all = b_all.at[0, :H1].set(b1[0].astype(jnp.float32))
    b_all = b_all.at[1, :NC].set(b2[0].astype(jnp.float32))

    # Detector decision threshold as an SMEM scalar: margin > -(bd1 - bd0).
    thr = (-(bd[0, 1] - bd[0, 0])).reshape(1, 1).astype(jnp.float32)
    return wf, b_all, w2b, thr, D, NC, H1


def combined_detector_model(x_nchw, params, *, tile_b=512, single_tile_max=256):
    wf, b_all, w2b, thr, D, NC, H1 = _prepare_params(params)
    B = x_nchw.shape[0]

    # NCHW -> (B, C*H*W) row-major flatten (== torch x.view(B, -1)).
    # NOTE: no bf16 cast and no pad here — x streams from HBM exactly once.
    x_flat = x_nchw.reshape(B, -1).astype(jnp.float32)

    if B <= single_tile_max:
        # Small batch: whole problem in VMEM, no grid -> no pipeline overhead.
        return pl.pallas_call(
            combined_detector_kernel,
            out_shape=jax.ShapeDtypeStruct((B, NC), jnp.float32),
            in_specs=[
                pl.BlockSpec(memory_space=pltpu.MemorySpace.VMEM),   # x
                pl.BlockSpec(memory_space=pltpu.MemorySpace.VMEM),   # wf
                pl.BlockSpec(memory_space=pltpu.MemorySpace.VMEM),   # biases
                pl.BlockSpec(memory_space=pltpu.MemorySpace.VMEM),   # w2
                pl.BlockSpec(memory_space=pltpu.MemorySpace.SMEM),   # threshold
            ],
            out_specs=pl.BlockSpec(memory_space=pltpu.MemorySpace.VMEM),
        )(x_flat, wf, b_all, w2b, thr)

    # Batched path: row-tiled grid, weights VMEM-resident (constant index_map),
    # "parallel" lets v7x's two TensorCores split the row tiles.  Keep >= 2
    # (preferably an even number of) tiles so both cores get work; cap the tile
    # size at tile_b so big batches still reach the HBM roofline tile regime.
    n_tiles = max(2, pl.cdiv(B, tile_b))
    n_tiles += n_tiles % 2                         # even split for 2 TCs
    tb = ((pl.cdiv(B, n_tiles) + 7) // 8) * 8      # sublane-aligned rows/tile
    n_tiles = pl.cdiv(B, tb)                       # last tile may be ragged

    # Estimated VMEM: double-buffered x/out tiles + resident weights.  Only
    # raise the scoped-VMEM limit if a user-chosen tile_b actually needs it
    # (v5e default scoped limit is 16 MiB).
    est_vmem = (2 * tb * D * 4 + 2 * tb * NC * 4
                + wf.size * 2 + b_all.size * 4 + w2b.size * 2)
    cp_kwargs = dict(dimension_semantics=("parallel",))
    if est_vmem > 12 * 1024 * 1024:
        cp_kwargs["vmem_limit_bytes"] = min(est_vmem + (4 << 20), 60 << 20)

    out = pl.pallas_call(
        combined_detector_kernel,
        out_shape=jax.ShapeDtypeStruct((B, NC), jnp.float32),
        grid=(n_tiles,),
        in_specs=[
            pl.BlockSpec((tb, D), lambda i: (i, 0)),            # streamed x
            pl.BlockSpec(wf.shape, lambda i: (0, 0)),           # resident W1|wdiff
            pl.BlockSpec(b_all.shape, lambda i: (0, 0)),        # resident biases
            pl.BlockSpec(w2b.shape, lambda i: (0, 0)),          # resident W2
            pl.BlockSpec(memory_space=pltpu.MemorySpace.SMEM),  # threshold scalar
        ],
        out_specs=pl.BlockSpec((tb, NC), lambda i: (i, 0)),
        compiler_params=pltpu.CompilerParams(**cp_kwargs),
    )(x_flat, wf, b_all, w2b, thr)
    return out


def _reference(x_nchw, params):
    """Pure-JAX f32 reference reproducing the PyTorch forward."""
    wd, bd, w1, b1, w2, b2 = params
    B = x_nchw.shape[0]
    xf = x_nchw.reshape(B, -1).astype(jnp.float32)
    det = xf @ wd + bd
    pred = jnp.argmax(det, axis=1)
    clean = (pred == 1)[:, None]
    h = jnp.maximum(xf @ w1 + b1, 0.0)
    main = h @ w2 + b2
    return jnp.where(clean, main, jnp.zeros_like(det)), det


def _check(x, params, out, margin=1e-2, tol=1e-2):
    ref, det = _reference(x, params)
    assert out.shape == ref.shape and out.dtype == jnp.float32
    assert bool(jnp.all(jnp.isfinite(out)))
    # Rows whose detector margin |det1 - det0| sits within bf16 rounding of a
    # tie may legitimately flip the discrete clean/adversarial decision versus
    # the f32 reference; exclude those knife-edge rows from the strict check.
    diff = det[:, 1] - det[:, 0]
    decided = jnp.abs(diff) > margin
    assert jnp.allclose(out[decided], ref[decided], rtol=tol, atol=tol)
    # Decided non-clean rows must be exactly zero (torch.zeros_like semantics).
    adv = decided & (diff <= 0)
    assert bool(jnp.all(out[adv] == 0.0))


if __name__ == "__main__":
    key = jax.random.PRNGKey(0)
    kx, kwd, kbd, kw1, kb1, kw2, kb2, kx2 = jax.random.split(key, 8)

    B, C, H, W = 2, 4, 16, 16
    D = C * H * W          # 1024
    NC = 2                 # detector / main-model class count
    H1 = 128               # main-model hidden width

    # Deterministic synthetic submodule parameters, stored (in, out): y = x @ W + b.
    wd = jax.random.normal(kwd, (D, NC), jnp.float32) * 0.02
    bd = jax.random.normal(kbd, (1, NC), jnp.float32) * 0.02
    w1 = jax.random.normal(kw1, (D, H1), jnp.float32) * 0.02
    b1 = jax.random.normal(kb1, (1, H1), jnp.float32) * 0.02
    w2 = jax.random.normal(kw2, (H1, NC), jnp.float32) * 0.02
    b2 = jax.random.normal(kb2, (1, NC), jnp.float32) * 0.02
    params = (wd, bd, w1, b1, w2, b2)

    # Module-sized case (B=2): single-tile, no-grid path.
    x = jax.random.normal(kx, (B, C, H, W), dtype=jnp.float32)
    out = jax.block_until_ready(combined_detector_model(x, params))
    _check(x, params, out)

    # Batched case: exercises the row-tiled grid (2 ragged tiles of 256 rows),
    # VMEM-resident weights, SMEM scalar threshold and "parallel" semantics.
    Bb = 500
    xb = jax.random.normal(kx2, (Bb, C, H, W), dtype=jnp.float32)
    outb = jax.block_until_ready(combined_detector_model(xb, params))
    _check(xb, params, outb)

    print("KERNEL_OK")
</pallas_src>

<mosaic_0001>
module attributes {stable_mosaic.version = 11 : i64} {
  func.func @combined_detector_kernel(%arg0: memref<2x1024xf32, #tpu.memory_space<vmem>>, %arg1: memref<1024x129xbf16, #tpu.memory_space<vmem>>, %arg2: memref<2x128xf32, #tpu.memory_space<vmem>>, %arg3: memref<128x2xbf16, #tpu.memory_space<vmem>>, %arg4: memref<1x1xf32, #tpu.memory_space<smem>>, %arg5: memref<2x2xf32, #tpu.memory_space<vmem>>) attributes {dimension_semantics = [], scalar_prefetch = 0 : i64, scratch_operands = 0 : i64, tpu.core_type = #tpu.core_type<tc>} {
    %c0 = arith.constant 0 : index
    %c0_0 = arith.constant 0 : index
    %0 = vector.load %arg0[%c0, %c0_0] : memref<2x1024xf32, #tpu.memory_space<vmem>>, vector<2x1024xf32>
    %1 = arith.truncf %0 : vector<2x1024xf32> to vector<2x1024xbf16>
    %c0_1 = arith.constant 0 : index
    %c0_2 = arith.constant 0 : index
    %2 = vector.load %arg1[%c0_1, %c0_2] : memref<1024x129xbf16, #tpu.memory_space<vmem>>, vector<1024x129xbf16>
    %cst = arith.constant dense<0.000000e+00> : vector<2x129xf32>
    %3 = tpu.matmul %1, %2, %cst {dimension_numbers = #tpu.dot_dimension_numbers<[1], [0], [0], [1], [0, 0, 1, 1], [], []>} : vector<2x1024xbf16>, vector<1024x129xbf16>, vector<2x129xf32> -> vector<2x129xf32>
    %4 = vector.extract_strided_slice %3 {offsets = [0, 0], sizes = [2, 128], strides = [1, 1]} : vector<2x129xf32> to vector<2x128xf32>
    %c0_3 = arith.constant 0 : index
    %c0_4 = arith.constant 0 : index
    %5 = vector.load %arg2[%c0_3, %c0_4] : memref<2x128xf32, #tpu.memory_space<vmem>>, vector<1x128xf32>
    %6 = vector.broadcast %5 : vector<1x128xf32> to vector<2x128xf32>
    %7 = arith.addf %4, %6 : vector<2x128xf32>
    %cst_5 = arith.constant 0.000000e+00 : f32
    %8 = vector.broadcast %cst_5 : f32 to vector<2x128xf32>
    %9 = arith.maximumf %7, %8 : vector<2x128xf32>
    %10 = vector.extract_strided_slice %3 {offsets = [0, 128], sizes = [2, 1], strides = [1, 1]} : vector<2x129xf32> to vector<2x1xf32>
    %c0_6 = arith.constant 0 : index
    %c0_7 = arith.constant 0 : index
    %11 = memref.load %arg4[%c0_6, %c0_7] : memref<1x1xf32, #tpu.memory_space<smem>>
    %12 = vector.broadcast %11 : f32 to vector<2x1xf32>
    %13 = arith.cmpf ogt, %10, %12 : vector<2x1xf32>
    %14 = arith.truncf %9 : vector<2x128xf32> to vector<2x128xbf16>
    %c0_8 = arith.constant 0 : index
    %c0_9 = arith.constant 0 : index
    %15 = vector.load %arg3[%c0_8, %c0_9] : memref<128x2xbf16, #tpu.memory_space<vmem>>, vector<128x2xbf16>
    %cst_10 = arith.constant dense<0.000000e+00> : vector<2x2xf32>
    %16 = tpu.matmul %14, %15, %cst_10 {dimension_numbers = #tpu.dot_dimension_numbers<[1], [0], [0], [1], [0, 0, 1, 1], [], []>} : vector<2x128xbf16>, vector<128x2xbf16>, vector<2x2xf32> -> vector<2x2xf32>
    %c1 = arith.constant 1 : index
    %c0_11 = arith.constant 0 : index
    %17 = vector.load %arg2[%c1, %c0_11] : memref<2x128xf32, #tpu.memory_space<vmem>>, vector<1x2xf32>
    %18 = vector.broadcast %17 : vector<1x2xf32> to vector<2x2xf32>
    %19 = arith.addf %16, %18 : vector<2x2xf32>
    %cst_12 = arith.constant 0.000000e+00 : f32
    %20 = vector.shape_cast %13 : vector<2x1xi1> to vector<2x1xi1>
    %21 = vector.broadcast %20 : vector<2x1xi1> to vector<2x2xi1>
    %22 = vector.broadcast %cst_12 : f32 to vector<2x2xf32>
    %23 = arith.select %21, %19, %22 : vector<2x2xi1>, vector<2x2xf32>
    %c0_13 = arith.constant 0 : index
    %c0_14 = arith.constant 0 : index
    %24 = vector.load %arg5[%c0_13, %c0_14] : memref<2x2xf32, #tpu.memory_space<vmem>>, vector<2x2xf32>
    tpu.vector_store %arg5[%c0_13, %c0_14], %23 {strides = array<i32>} : memref<2x2xf32, #tpu.memory_space<vmem>>, vector<2x2xf32>,
    return
  }
}

</mosaic_0001>

<llo_original>
// kernel: tpu_custom_call.1
$region0: #{tpu_custom_call.1}
  #allocation0 [shape = 'u32[]', space=smem, size = 0x4, offset = 0x4, fixed_abs, tag = 'smem constant byte address 0x4 - core index']
  #allocation1 [shape = 'u32[144,128]{1,0:T(1,128)}', space=vmem, size = 0x12000, scoped, tag = 'internal scratch']
  #allocation2 [shape = 'f32[1,1]{1,0:T(1,128)S(6)}', space=smem, size = 0x200, scoped, tag = 'scoped memory for tpu_custom_call.1']
  %s0 = inlined_call_operand.vmem [shape: f32[2,1024], index: 0, kind: input, shape index: {}]
  %s1 = inlined_call_operand.vmem [shape: bf16[1024,129], index: 1, kind: input, shape index: {}]
  %s2 = inlined_call_operand.vmem [shape: f32[2,128], index: 2, kind: input, shape index: {}]
  %s3 = inlined_call_operand.vmem [shape: bf16[128,2], index: 3, kind: input, shape index: {}]
  %s4 = inlined_call_operand.<no memory space> [shape: f32[1,1], index: 4, kind: input, shape index: {}]
  %s5 = inlined_call_operand.hbm [shape: f32[2,2], index: 5, kind: output, shape index: {}]
  %s6 = sld [smem:[#allocation0]]
  $region30: #{tpu_custom_call.1} parent=0
    _
  %s8 = ssub.s32 1, %s6
  %s9 = scalar_select 0, %s8, %s6
  %10 = sst [smem:[#allocation2]] %s4
  $region1: #{tpu_custom_call.1} parent=0
    #allocation3 [shape = 'u8[1024]{0}', space=vmem, size = 0x400, scoped, tag = 'output window, operand 0, single buffered']
    #allocation4 [shape = 's32[1]{0}', space=sflag, size = 0x4, scoped, tag = 'scoped memory for tpu_custom_call.1']
    %11 = vsyncpa [#allocation4], 0
    // Predicated region
    $region2: #{tpu_custom_call.1} parent=1 // pred_check
      _
    $region3: #{tpu_custom_call.1} parent=1 // pred_check_branch
      %13 = sbr.rel (0) target = $region5
    $region4: #{tpu_custom_call.1} parent=1 // pred_region
      _
    $region5: #{tpu_custom_call.1} parent=1 // pred_fallthru
      _
    // Predicated region
    $region6: #{tpu_custom_call.1} parent=1 // pred_check
      _
    $region7: #{tpu_custom_call.1} parent=1 // pred_check_branch
      %15 = sbr.rel (0) target = $region9
    $region8: #{tpu_custom_call.1} parent=1 // pred_region
      _
    $region9: #{tpu_custom_call.1} parent=1 // pred_fallthru
      _
    // Predicated region
    $region10: #{tpu_custom_call.1} parent=1 // pred_check
      _
    $region11: #{tpu_custom_call.1} parent=1 // pred_check_branch
      %17 = sbr.rel (0) target = $region13
    $region12: #{tpu_custom_call.1} parent=1 // pred_region
      _
    $region13: #{tpu_custom_call.1} parent=1 // pred_fallthru
      _
    // Predicated region
    $region14: #{tpu_custom_call.1} parent=1 // pred_check
      _
    $region15: #{tpu_custom_call.1} parent=1 // pred_check_branch
      %19 = sbr.rel (0) target = $region17
    $region16: #{tpu_custom_call.1} parent=1 // pred_region
      _
    $region17: #{tpu_custom_call.1} parent=1 // pred_fallthru
      _
    // Predicated region
    $region18: #{tpu_custom_call.1} parent=1 // pred_check
      _
    $region19: #{tpu_custom_call.1} parent=1 // pred_check_branch
      %21 = sbr.rel (0) target = $region21
    $region20: #{tpu_custom_call.1} parent=1 // pred_region
      _
    $region21: #{tpu_custom_call.1} parent=1 // pred_fallthru
      _
    %v23 = vld [vmem:[%s0] sm:$0xff]
    %v24 = vld [vmem:[%s0 + $0x8] sm:$0xff]
    %v27 = vcombine.high %v23, %v23
    %v29 = vunpack.c.l.s4 1983009808
    %v30 = vunpack.c.0.s8 %v29
    %v31 = vlaneseq
    %v32 = vshrl.u32 %v31, 7
    %v33 = vsub.s32 %v30, %v32
    %v34 = vrot.slane %v23, %v33
    %v36 = vunpack.c.l.s4 1983009808
    %v37 = vunpack.c.0.s8 %v36
    %v38 = vlaneseq
    %v39 = vshrl.u32 %v38, 7
    %v40 = vsub.s32 %v37, %v39
    %v41 = vrot.slane %v27, %v40
    %v42 = vcombine.high %v34, %v34
    %v43 = vcombine.high %v41, %v41
    %v44 = vcombine.high %v24, %v24
    %v46 = vunpack.c.l.s4 1983009808
    %v47 = vunpack.c.0.s8 %v46
    %v48 = vlaneseq
    %v49 = vshrl.u32 %v48, 7
    %v50 = vsub.s32 %v47, %v49
    %v51 = vrot.slane %v24, %v50
    %v53 = vunpack.c.l.s4 1983009808
    %v54 = vunpack.c.0.s8 %v53
    %v55 = vlaneseq
    %v56 = vshrl.u32 %v55, 7
    %v57 = vsub.s32 %v54, %v56
    %v58 = vrot.slane %v44, %v57
    %v59 = vcombine.high %v51, %v51
    %v60 = vcombine.high %v58, %v58
    %v69 = vpack.c.bf16 %v34, %v34
    %v70 = vpack.c.bf16 %v42, %v42
    %v71 = vpack.c.bf16 %v41, %v41
    %v72 = vpack.c.bf16 %v43, %v43
    %v73 = vpack.c.bf16 %v51, %v51
    %v74 = vpack.c.bf16 %v59, %v59
    %v75 = vpack.c.bf16 %v58, %v58
    %v76 = vpack.c.bf16 %v60, %v60
    %v77 = vld [vmem:[%s1] sm:$0xff]
    %v78 = vld [vmem:[%s1 + $0x8] sm:$0xff]
    %v79 = vld [vmem:[%s1 + $0x10] sm:$0xff]
    %v80 = vld [vmem:[%s1 + $0x18] sm:$0xff]
    %v81 = vld [vmem:[%s1 + $0x20] sm:$0xff]
    %v82 = vld [vmem:[%s1 + $0x28] sm:$0xff]
    %v83 = vld [vmem:[%s1 + $0x30] sm:$0xff]
    %v84 = vld [vmem:[%s1 + $0x38] sm:$0xff]
    %v85 = vld [vmem:[%s1 + $0x40] sm:$0xff]
    %v86 = vld [vmem:[%s1 + $0x48] sm:$0xff]
    %v87 = vld [vmem:[%s1 + $0x50] sm:$0xff]
    %v88 = vld [vmem:[%s1 + $0x58] sm:$0xff]
    %v89 = vld [vmem:[%s1 + $0x60] sm:$0xff]
    %v90 = vld [vmem:[%s1 + $0x68] sm:$0xff]
    %v91 = vld [vmem:[%s1 + $0x70] sm:$0xff]
    %v92 = vld [vmem:[%s1 + $0x78] sm:$0xff]
    %v93 = vld [vmem:[%s1 + $0x80] sm:$0xff]
    %v94 = vld [vmem:[%s1 + $0x88] sm:$0xff]
    %v95 = vld [vmem:[%s1 + $0x90] sm:$0xff]
    %v96 = vld [vmem:[%s1 + $0x98] sm:$0xff]
    %v97 = vld [vmem:[%s1 + $0xa0] sm:$0xff]
    %v98 = vld [vmem:[%s1 + $0xa8] sm:$0xff]
    %v99 = vld [vmem:[%s1 + $0xb0] sm:$0xff]
    %v100 = vld [vmem:[%s1 + $0xb8] sm:$0xff]
    %v101 = vld [vmem:[%s1 + $0xc0] sm:$0xff]
    %v102 = vld [vmem:[%s1 + $0xc8] sm:$0xff]
    %v103 = vld [vmem:[%s1 + $0xd0] sm:$0xff]
    %v104 = vld [vmem:[%s1 + $0xd8] sm:$0xff]
    %v105 = vld [vmem:[%s1 + $0xe0] sm:$0xff]
    %v106 = vld [vmem:[%s1 + $0xe8] sm:$0xff]
    %v107 = vld [vmem:[%s1 + $0xf0] sm:$0xff]
    %v108 = vld [vmem:[%s1 + $0xf8] sm:$0xff]
    %v109 = vld [vmem:[%s1 + $0x100] sm:$0xff]
    %v110 = vld [vmem:[%s1 + $0x108] sm:$0xff]
    %v111 = vld [vmem:[%s1 + $0x110] sm:$0xff]
    %v112 = vld [vmem:[%s1 + $0x118] sm:$0xff]
    %v113 = vld [vmem:[%s1 + $0x120] sm:$0xff]
    %v114 = vld [vmem:[%s1 + $0x128] sm:$0xff]
    %v115 = vld [vmem:[%s1 + $0x130] sm:$0xff]
    %v116 = vld [vmem:[%s1 + $0x138] sm:$0xff]
    %v117 = vld [vmem:[%s1 + $0x140] sm:$0xff]
    %v118 = vld [vmem:[%s1 + $0x148] sm:$0xff]
    %v119 = vld [vmem:[%s1 + $0x150] sm:$0xff]
    %v120 = vld [vmem:[%s1 + $0x158] sm:$0xff]
    %v121 = vld [vmem:[%s1 + $0x160] sm:$0xff]
    %v122 = vld [vmem:[%s1 + $0x168] sm:$0xff]
    %v123 = vld [vmem:[%s1 + $0x170] sm:$0xff]
    %v124 = vld [vmem:[%s1 + $0x178] sm:$0xff]
    %v125 = vld [vmem:[%s1 + $0x180] sm:$0xff]
    %v126 = vld [vmem:[%s1 + $0x188] sm:$0xff]
    %v127 = vld [vmem:[%s1 + $0x190] sm:$0xff]
    %v128 = vld [vmem:[%s1 + $0x198] sm:$0xff]
    %v129 = vld [vmem:[%s1 + $0x1a0] sm:$0xff]
    %v130 = vld [vmem:[%s1 + $0x1a8] sm:$0xff]
    %v131 = vld [vmem:[%s1 + $0x1b0] sm:$0xff]
    %v132 = vld [vmem:[%s1 + $0x1b8] sm:$0xff]
    %v133 = vld [vmem:[%s1 + $0x1c0] sm:$0xff]
    %v134 = vld [vmem:[%s1 + $0x1c8] sm:$0xff]
    %v135 = vld [vmem:[%s1 + $0x1d0] sm:$0xff]
    %v136 = vld [vmem:[%s1 + $0x1d8] sm:$0xff]
    %v137 = vld [vmem:[%s1 + $0x1e0] sm:$0xff]
    %v138 = vld [vmem:[%s1 + $0x1e8] sm:$0xff]
    %v139 = vld [vmem:[%s1 + $0x1f0] sm:$0xff]
    %v140 = vld [vmem:[%s1 + $0x1f8] sm:$0xff]
    %v141 = vld [vmem:[%s1 + $0x200] sm:$0xff]
    %v142 = vld [vmem:[%s1 + $0x208] sm:$0xff]
    %v143 = vld [vmem:[%s1 + $0x210] sm:$0xff]
    %v144 = vld [vmem:[%s1 + $0x218] sm:$0xff]
    %v145 = vld [vmem:[%s1 + $0x220] sm:$0xff]
    %v146 = vld [vmem:[%s1 + $0x228] sm:$0xff]
    %v147 = vld [vmem:[%s1 + $0x230] sm:$0xff]
    %v148 = vld [vmem:[%s1 + $0x238] sm:$0xff]
    %v149 = vld [vmem:[%s1 + $0x240] sm:$0xff]
    %v150 = vld [vmem:[%s1 + $0x248] sm:$0xff]
    %v151 = vld [vmem:[%s1 + $0x250] sm:$0xff]
    %v152 = vld [vmem:[%s1 + $0x258] sm:$0xff]
    %v153 = vld [vmem:[%s1 + $0x260] sm:$0xff]
    %v154 = vld [vmem:[%s1 + $0x268] sm:$0xff]
    %v155 = vld [vmem:[%s1 + $0x270] sm:$0xff]
    %v156 = vld [vmem:[%s1 + $0x278] sm:$0xff]
    %v157 = vld [vmem:[%s1 + $0x280] sm:$0xff]
    %v158 = vld [vmem:[%s1 + $0x288] sm:$0xff]
    %v159 = vld [vmem:[%s1 + $0x290] sm:$0xff]
    %v160 = vld [vmem:[%s1 + $0x298] sm:$0xff]
    %v161 = vld [vmem:[%s1 + $0x2a0] sm:$0xff]
    %v162 = vld [vmem:[%s1 + $0x2a8] sm:$0xff]
    %v163 = vld [vmem:[%s1 + $0x2b0] sm:$0xff]
    %v164 = vld [vmem:[%s1 + $0x2b8] sm:$0xff]
    %v165 = vld [vmem:[%s1 + $0x2c0] sm:$0xff]
    %v166 = vld [vmem:[%s1 + $0x2c8] sm:$0xff]
    %v167 = vld [vmem:[%s1 + $0x2d0] sm:$0xff]
    %v168 = vld [vmem:[%s1 + $0x2d8] sm:$0xff]
    %v169 = vld [vmem:[%s1 + $0x2e0] sm:$0xff]
    %v170 = vld [vmem:[%s1 + $0x2e8] sm:$0xff]
    %v171 = vld [vmem:[%s1 + $0x2f0] sm:$0xff]
    %v172 = vld [vmem:[%s1 + $0x2f8] sm:$0xff]
    %v173 = vld [vmem:[%s1 + $0x300] sm:$0xff]
    %v174 = vld [vmem:[%s1 + $0x308] sm:$0xff]
    %v175 = vld [vmem:[%s1 + $0x310] sm:$0xff]
    %v176 = vld [vmem:[%s1 + $0x318] sm:$0xff]
    %v177 = vld [vmem:[%s1 + $0x320] sm:$0xff]
    %v178 = vld [vmem:[%s1 + $0x328] sm:$0xff]
    %v179 = vld [vmem:[%s1 + $0x330] sm:$0xff]
    %v180 = vld [vmem:[%s1 + $0x338] sm:$0xff]
    %v181 = vld [vmem:[%s1 + $0x340] sm:$0xff]
    %v182 = vld [vmem:[%s1 + $0x348] sm:$0xff]
    %v183 = vld [vmem:[%s1 + $0x350] sm:$0xff]
    %v184 = vld [vmem:[%s1 + $0x358] sm:$0xff]
    %v185 = vld [vmem:[%s1 + $0x360] sm:$0xff]
    %v186 = vld [vmem:[%s1 + $0x368] sm:$0xff]
    %v187 = vld [vmem:[%s1 + $0x370] sm:$0xff]
    %v188 = vld [vmem:[%s1 + $0x378] sm:$0xff]
    %v189 = vld [vmem:[%s1 + $0x380] sm:$0xff]
    %v190 = vld [vmem:[%s1 + $0x388] sm:$0xff]
    %v191 = vld [vmem:[%s1 + $0x390] sm:$0xff]
    %v192 = vld [vmem:[%s1 + $0x398] sm:$0xff]
    %v193 = vld [vmem:[%s1 + $0x3a0] sm:$0xff]
    %v194 = vld [vmem:[%s1 + $0x3a8] sm:$0xff]
    %v195 = vld [vmem:[%s1 + $0x3b0] sm:$0xff]
    %v196 = vld [vmem:[%s1 + $0x3b8] sm:$0xff]
    %v197 = vld [vmem:[%s1 + $0x3c0] sm:$0xff]
    %v198 = vld [vmem:[%s1 + $0x3c8] sm:$0xff]
    %v199 = vld [vmem:[%s1 + $0x3d0] sm:$0xff]
    %v200 = vld [vmem:[%s1 + $0x3d8] sm:$0xff]
    %v201 = vld [vmem:[%s1 + $0x3e0] sm:$0xff]
    %v202 = vld [vmem:[%s1 + $0x3e8] sm:$0xff]
    %v203 = vld [vmem:[%s1 + $0x3f0] sm:$0xff]
    %v204 = vld [vmem:[%s1 + $0x3f8] sm:$0xff]
    %v333 = vunpack.c.l.b16 %v77
    %v334 = vunpack.c.h.b16 %v77
    %v335 = vunpack.c.l.b16 %v78
    %v336 = vunpack.c.h.b16 %v78
    %v337 = vunpack.c.l.b16 %v79
    %v338 = vunpack.c.h.b16 %v79
    %v339 = vunpack.c.l.b16 %v80
    %v340 = vunpack.c.h.b16 %v80
    %v341 = vunpack.c.l.b16 %v81
    %v342 = vunpack.c.h.b16 %v81
    %v343 = vunpack.c.l.b16 %v82
    %v344 = vunpack.c.h.b16 %v82
    %v345 = vunpack.c.l.b16 %v83
    %v346 = vunpack.c.h.b16 %v83
    %v347 = vunpack.c.l.b16 %v84
    %v348 = vunpack.c.h.b16 %v84
    %v349 = vunpack.c.l.b16 %v85
    %v350 = vunpack.c.h.b16 %v85
    %v351 = vunpack.c.l.b16 %v86
    %v352 = vunpack.c.h.b16 %v86
    %v353 = vunpack.c.l.b16 %v87
    %v354 = vunpack.c.h.b16 %v87
    %v355 = vunpack.c.l.b16 %v88
    %v356 = vunpack.c.h.b16 %v88
    %v357 = vunpack.c.l.b16 %v89
    %v358 = vunpack.c.h.b16 %v89
    %v359 = vunpack.c.l.b16 %v90
    %v360 = vunpack.c.h.b16 %v90
    %v361 = vunpack.c.l.b16 %v91
    %v362 = vunpack.c.h.b16 %v91
    %v363 = vunpack.c.l.b16 %v92
    %v364 = vunpack.c.h.b16 %v92
    %v365 = vunpack.c.l.b16 %v93
    %v366 = vunpack.c.h.b16 %v93
    %v367 = vunpack.c.l.b16 %v94
    %v368 = vunpack.c.h.b16 %v94
    %v369 = vunpack.c.l.b16 %v95
    %v370 = vunpack.c.h.b16 %v95
    %v371 = vunpack.c.l.b16 %v96
    %v372 = vunpack.c.h.b16 %v96
    %v373 = vunpack.c.l.b16 %v97
    %v374 = vunpack.c.h.b16 %v97
    %v375 = vunpack.c.l.b16 %v98
    %v376 = vunpack.c.h.b16 %v98
    %v377 = vunpack.c.l.b16 %v99
    %v378 = vunpack.c.h.b16 %v99
    %v379 = vunpack.c.l.b16 %v100
    %v380 = vunpack.c.h.b16 %v100
    %v381 = vunpack.c.l.b16 %v101
    %v382 = vunpack.c.h.b16 %v101
    %v383 = vunpack.c.l.b16 %v102
    %v384 = vunpack.c.h.b16 %v102
    %v385 = vunpack.c.l.b16 %v103
    %v386 = vunpack.c.h.b16 %v103
    %v387 = vunpack.c.l.b16 %v104
    %v388 = vunpack.c.h.b16 %v104
    %v389 = vunpack.c.l.b16 %v105
    %v390 = vunpack.c.h.b16 %v105
    %v391 = vunpack.c.l.b16 %v106
    %v392 = vunpack.c.h.b16 %v106
    %v393 = vunpack.c.l.b16 %v107
    %v394 = vunpack.c.h.b16 %v107
    %v395 = vunpack.c.l.b16 %v108
    %v396 = vunpack.c.h.b16 %v108
    %v397 = vunpack.c.l.b16 %v109
    %v398 = vunpack.c.h.b16 %v109
    %v399 = vunpack.c.l.b16 %v110
    %v400 = vunpack.c.h.b16 %v110
    %v401 = vunpack.c.l.b16 %v111
    %v402 = vunpack.c.h.b16 %v111
    %v403 = vunpack.c.l.b16 %v112
    %v404 = vunpack.c.h.b16 %v112
    %v405 = vunpack.c.l.b16 %v113
    %v406 = vunpack.c.h.b16 %v113
    %v407 = vunpack.c.l.b16 %v114
    %v408 = vunpack.c.h.b16 %v114
    %v409 = vunpack.c.l.b16 %v115
    %v410 = vunpack.c.h.b16 %v115
    %v411 = vunpack.c.l.b16 %v116
    %v412 = vunpack.c.h.b16 %v116
    %v413 = vunpack.c.l.b16 %v117
    %v414 = vunpack.c.h.b16 %v117
    %v415 = vunpack.c.l.b16 %v118
    %v416 = vunpack.c.h.b16 %v118
    %v417 = vunpack.c.l.b16 %v119
    %v418 = vunpack.c.h.b16 %v119
    %v419 = vunpack.c.l.b16 %v120
    %v420 = vunpack.c.h.b16 %v120
    %v421 = vunpack.c.l.b16 %v121
    %v422 = vunpack.c.h.b16 %v121
    %v423 = vunpack.c.l.b16 %v122
    %v424 = vunpack.c.h.b16 %v122
    %v425 = vunpack.c.l.b16 %v123
    %v426 = vunpack.c.h.b16 %v123
    %v427 = vunpack.c.l.b16 %v124
    %v428 = vunpack.c.h.b16 %v124
    %v429 = vunpack.c.l.b16 %v125
    %v430 = vunpack.c.h.b16 %v125
    %v431 = vunpack.c.l.b16 %v126
    %v432 = vunpack.c.h.b16 %v126
    %v433 = vunpack.c.l.b16 %v127
    %v434 = vunpack.c.h.b16 %v127
    %v435 = vunpack.c.l.b16 %v128
    %v436 = vunpack.c.h.b16 %v128
    %v437 = vunpack.c.l.b16 %v129
    %v438 = vunpack.c.h.b16 %v129
    %v439 = vunpack.c.l.b16 %v130
    %v440 = vunpack.c.h.b16 %v130
    %v441 = vunpack.c.l.b16 %v131
    %v442 = vunpack.c.h.b16 %v131
    %v443 = vunpack.c.l.b16 %v132
    %v444 = vunpack.c.h.b16 %v132
    %v445 = vunpack.c.l.b16 %v133
    %v446 = vunpack.c.h.b16 %v133
    %v447 = vunpack.c.l.b16 %v134
    %v448 = vunpack.c.h.b16 %v134
    %v449 = vunpack.c.l.b16 %v135
    %v450 = vunpack.c.h.b16 %v135
    %v451 = vunpack.c.l.b16 %v136
    %v452 = vunpack.c.h.b16 %v136
    %v453 = vunpack.c.l.b16 %v137
    %v454 = vunpack.c.h.b16 %v137
    %v455 = vunpack.c.l.b16 %v138
    %v456 = vunpack.c.h.b16 %v138
    %v457 = vunpack.c.l.b16 %v139
    %v458 = vunpack.c.h.b16 %v139
    %v459 = vunpack.c.l.b16 %v140
    %v460 = vunpack.c.h.b16 %v140
    %v461 = vunpack.c.l.b16 %v141
    %v462 = vunpack.c.h.b16 %v141
    %v463 = vunpack.c.l.b16 %v142
    %v464 = vunpack.c.h.b16 %v142
    %v465 = vunpack.c.l.b16 %v143
    %v466 = vunpack.c.h.b16 %v143
    %v467 = vunpack.c.l.b16 %v144
    %v468 = vunpack.c.h.b16 %v144
    %v469 = vunpack.c.l.b16 %v145
    %v470 = vunpack.c.h.b16 %v145
    %v471 = vunpack.c.l.b16 %v146
    %v472 = vunpack.c.h.b16 %v146
    %v473 = vunpack.c.l.b16 %v147
    %v474 = vunpack.c.h.b16 %v147
    %v475 = vunpack.c.l.b16 %v148
    %v476 = vunpack.c.h.b16 %v148
    %v477 = vunpack.c.l.b16 %v149
    %v478 = vunpack.c.h.b16 %v149
    %v479 = vunpack.c.l.b16 %v150
    %v480 = vunpack.c.h.b16 %v150
    %v481 = vunpack.c.l.b16 %v151
    %v482 = vunpack.c.h.b16 %v151
    %v483 = vunpack.c.l.b16 %v152
    %v484 = vunpack.c.h.b16 %v152
    %v485 = vunpack.c.l.b16 %v153
    %v486 = vunpack.c.h.b16 %v153
    %v487 = vunpack.c.l.b16 %v154
    %v488 = vunpack.c.h.b16 %v154
    %v489 = vunpack.c.l.b16 %v155
    %v490 = vunpack.c.h.b16 %v155
    %v491 = vunpack.c.l.b16 %v156
    %v492 = vunpack.c.h.b16 %v156
    %v493 = vunpack.c.l.b16 %v157
    %v494 = vunpack.c.h.b16 %v157
    %v495 = vunpack.c.l.b16 %v158
    %v496 = vunpack.c.h.b16 %v158
    %v497 = vunpack.c.l.b16 %v159
    %v498 = vunpack.c.h.b16 %v159
    %v499 = vunpack.c.l.b16 %v160
    %v500 = vunpack.c.h.b16 %v160
    %v501 = vunpack.c.l.b16 %v161
    %v502 = vunpack.c.h.b16 %v161
    %v503 = vunpack.c.l.b16 %v162
    %v504 = vunpack.c.h.b16 %v162
    %v505 = vunpack.c.l.b16 %v163
    %v506 = vunpack.c.h.b16 %v163
    %v507 = vunpack.c.l.b16 %v164
    %v508 = vunpack.c.h.b16 %v164
    %v509 = vunpack.c.l.b16 %v165
    %v510 = vunpack.c.h.b16 %v165
    %v511 = vunpack.c.l.b16 %v166
    %v512 = vunpack.c.h.b16 %v166
    %v513 = vunpack.c.l.b16 %v167
    %v514 = vunpack.c.h.b16 %v167
    %v515 = vunpack.c.l.b16 %v168
    %v516 = vunpack.c.h.b16 %v168
    %v517 = vunpack.c.l.b16 %v169
    %v518 = vunpack.c.h.b16 %v169
    %v519 = vunpack.c.l.b16 %v170
    %v520 = vunpack.c.h.b16 %v170
    %v521 = vunpack.c.l.b16 %v171
    %v522 = vunpack.c.h.b16 %v171
    %v523 = vunpack.c.l.b16 %v172
    %v524 = vunpack.c.h.b16 %v172
    %v525 = vunpack.c.l.b16 %v173
    %v526 = vunpack.c.h.b16 %v173
    %v527 = vunpack.c.l.b16 %v174
    %v528 = vunpack.c.h.b16 %v174
    %v529 = vunpack.c.l.b16 %v175
    %v530 = vunpack.c.h.b16 %v175
    %v531 = vunpack.c.l.b16 %v176
    %v532 = vunpack.c.h.b16 %v176
    %v533 = vunpack.c.l.b16 %v177
    %v534 = vunpack.c.h.b16 %v177
    %v535 = vunpack.c.l.b16 %v178
    %v536 = vunpack.c.h.b16 %v178
    %v537 = vunpack.c.l.b16 %v179
    %v538 = vunpack.c.h.b16 %v179
    %v539 = vunpack.c.l.b16 %v180
    %v540 = vunpack.c.h.b16 %v180
    %v541 = vunpack.c.l.b16 %v181
    %v542 = vunpack.c.h.b16 %v181
    %v543 = vunpack.c.l.b16 %v182
    %v544 = vunpack.c.h.b16 %v182
    %v545 = vunpack.c.l.b16 %v183
    %v546 = vunpack.c.h.b16 %v183
    %v547 = vunpack.c.l.b16 %v184
    %v548 = vunpack.c.h.b16 %v184
    %v549 = vunpack.c.l.b16 %v185
    %v550 = vunpack.c.h.b16 %v185
    %v551 = vunpack.c.l.b16 %v186
    %v552 = vunpack.c.h.b16 %v186
    %v553 = vunpack.c.l.b16 %v187
    %v554 = vunpack.c.h.b16 %v187
    %v555 = vunpack.c.l.b16 %v188
    %v556 = vunpack.c.h.b16 %v188
    %v557 = vunpack.c.l.b16 %v189
    %v558 = vunpack.c.h.b16 %v189
    %v559 = vunpack.c.l.b16 %v190
    %v560 = vunpack.c.h.b16 %v190
    %v561 = vunpack.c.l.b16 %v191
    %v562 = vunpack.c.h.b16 %v191
    %v563 = vunpack.c.l.b16 %v192
    %v564 = vunpack.c.h.b16 %v192
    %v565 = vunpack.c.l.b16 %v193
    %v566 = vunpack.c.h.b16 %v193
    %v567 = vunpack.c.l.b16 %v194
    %v568 = vunpack.c.h.b16 %v194
    %v569 = vunpack.c.l.b16 %v195
    %v570 = vunpack.c.h.b16 %v195
    %v571 = vunpack.c.l.b16 %v196
    %v572 = vunpack.c.h.b16 %v196
    %v573 = vunpack.c.l.b16 %v197
    %v574 = vunpack.c.h.b16 %v197
    %v575 = vunpack.c.l.b16 %v198
    %v576 = vunpack.c.h.b16 %v198
    %v577 = vunpack.c.l.b16 %v199
    %v578 = vunpack.c.h.b16 %v199
    %v579 = vunpack.c.l.b16 %v200
    %v580 = vunpack.c.h.b16 %v200
    %v581 = vunpack.c.l.b16 %v201
    %v582 = vunpack.c.h.b16 %v201
    %v583 = vunpack.c.l.b16 %v202
    %v584 = vunpack.c.h.b16 %v202
    %v585 = vunpack.c.l.b16 %v203
    %v586 = vunpack.c.h.b16 %v203
    %v587 = vunpack.c.l.b16 %v204
    %v588 = vunpack.c.h.b16 %v204
    %v589 = vpack.c.b16 %v335, %v333
    %v590 = vpack.c.b16 %v336, %v334
    %v591 = vpack.c.b16 %v339, %v337
    %v592 = vpack.c.b16 %v340, %v338
    %v593 = vpack.c.b16 %v343, %v341
    %v594 = vpack.c.b16 %v344, %v342
    %v595 = vpack.c.b16 %v347, %v345
    %v596 = vpack.c.b16 %v348, %v346
    %v597 = vpack.c.b16 %v351, %v349
    %v598 = vpack.c.b16 %v352, %v350
    %v599 = vpack.c.b16 %v355, %v353
    %v600 = vpack.c.b16 %v356, %v354
    %v601 = vpack.c.b16 %v359, %v357
    %v602 = vpack.c.b16 %v360, %v358
    %v603 = vpack.c.b16 %v363, %v361
    %v604 = vpack.c.b16 %v364, %v362
    %v605 = vpack.c.b16 %v367, %v365
    %v606 = vpack.c.b16 %v368, %v366
    %v607 = vpack.c.b16 %v371, %v369
    %v608 = vpack.c.b16 %v372, %v370
    %v609 = vpack.c.b16 %v375, %v373
    %v610 = vpack.c.b16 %v376, %v374
    %v611 = vpack.c.b16 %v379, %v377
    %v612 = vpack.c.b16 %v380, %v378
    %v613 = vpack.c.b16 %v383, %v381
    %v614 = vpack.c.b16 %v384, %v382
    %v615 = vpack.c.b16 %v387, %v385
    %v616 = vpack.c.b16 %v388, %v386
    %v617 = vpack.c.b16 %v391, %v389
    %v618 = vpack.c.b16 %v392, %v390
    %v619 = vpack.c.b16 %v395, %v393
    %v620 = vpack.c.b16 %v396, %v394
    %v621 = vpack.c.b16 %v399, %v397
    %v622 = vpack.c.b16 %v400, %v398
    %v623 = vpack.c.b16 %v403, %v401
    %v624 = vpack.c.b16 %v404, %v402
    %v625 = vpack.c.b16 %v407, %v405
    %v626 = vpack.c.b16 %v408, %v406
    %v627 = vpack.c.b16 %v411, %v409
    %v628 = vpack.c.b16 %v412, %v410
    %v629 = vpack.c.b16 %v415, %v413
    %v630 = vpack.c.b16 %v416, %v414
    %v631 = vpack.c.b16 %v419, %v417
    %v632 = vpack.c.b16 %v420, %v418
    %v633 = vpack.c.b16 %v423, %v421
    %v634 = vpack.c.b16 %v424, %v422
    %v635 = vpack.c.b16 %v427, %v425
    %v636 = vpack.c.b16 %v428, %v426
    %v637 = vpack.c.b16 %v431, %v429
    %v638 = vpack.c.b16 %v432, %v430
    %v639 = vpack.c.b16 %v435, %v433
    %v640 = vpack.c.b16 %v436, %v434
    %v641 = vpack.c.b16 %v439, %v437
    %v642 = vpack.c.b16 %v440, %v438
    %v643 = vpack.c.b16 %v443, %v441
    %v644 = vpack.c.b16 %v444, %v442
    %v645 = vpack.c.b16 %v447, %v445
    %v646 = vpack.c.b16 %v448, %v446
    %v647 = vpack.c.b16 %v451, %v449
    %v648 = vpack.c.b16 %v452, %v450
    %v649 = vpack.c.b16 %v455, %v453
    %v650 = vpack.c.b16 %v456, %v454
    %v651 = vpack.c.b16 %v459, %v457
    %v652 = vpack.c.b16 %v460, %v458
    %v653 = vpack.c.b16 %v463, %v461
    %v654 = vpack.c.b16 %v464, %v462
    %v655 = vpack.c.b16 %v467, %v465
    %v656 = vpack.c.b16 %v468, %v466
    %v657 = vpack.c.b16 %v471, %v469
    %v658 = vpack.c.b16 %v472, %v470
    %v659 = vpack.c.b16 %v475, %v473
    %v660 = vpack.c.b16 %v476, %v474
    %v661 = vpack.c.b16 %v479, %v477
    %v662 = vpack.c.b16 %v480, %v478
    %v663 = vpack.c.b16 %v483, %v481
    %v664 = vpack.c.b16 %v484, %v482
    %v665 = vpack.c.b16 %v487, %v485
    %v666 = vpack.c.b16 %v488, %v486
    %v667 = vpack.c.b16 %v491, %v489
    %v668 = vpack.c.b16 %v492, %v490
    %v669 = vpack.c.b16 %v495, %v493
    %v670 = vpack.c.b16 %v496, %v494
    %v671 = vpack.c.b16 %v499, %v497
    %v672 = vpack.c.b16 %v500, %v498
    %v673 = vpack.c.b16 %v503, %v501
    %v674 = vpack.c.b16 %v504, %v502
    %v675 = vpack.c.b16 %v507, %v505
    %v676 = vpack.c.b16 %v508, %v506
    %v677 = vpack.c.b16 %v511, %v509
    %v678 = vpack.c.b16 %v512, %v510
    %v679 = vpack.c.b16 %v515, %v513
    %v680 = vpack.c.b16 %v516, %v514
    %v681 = vpack.c.b16 %v519, %v517
    %v682 = vpack.c.b16 %v520, %v518
    %v683 = vpack.c.b16 %v523, %v521
    %v684 = vpack.c.b16 %v524, %v522
    %v685 = vpack.c.b16 %v527, %v525
    %v686 = vpack.c.b16 %v528, %v526
    %v687 = vpack.c.b16 %v531, %v529
    %v688 = vpack.c.b16 %v532, %v530
    %v689 = vpack.c.b16 %v535, %v533
    %v690 = vpack.c.b16 %v536, %v534
    %v691 = vpack.c.b16 %v539, %v537
    %v692 = vpack.c.b16 %v540, %v538
    %v693 = vpack.c.b16 %v543, %v541
    %v694 = vpack.c.b16 %v544, %v542
    %v695 = vpack.c.b16 %v547, %v545
    %v696 = vpack.c.b16 %v548, %v546
    %v697 = vpack.c.b16 %v551, %v549
    %v698 = vpack.c.b16 %v552, %v550
    %v699 = vpack.c.b16 %v555, %v553
    %v700 = vpack.c.b16 %v556, %v554
    %v701 = vpack.c.b16 %v559, %v557
    %v702 = vpack.c.b16 %v560, %v558
    %v703 = vpack.c.b16 %v563, %v561
    %v704 = vpack.c.b16 %v564, %v562
    %v705 = vpack.c.b16 %v567, %v565
    %v706 = vpack.c.b16 %v568, %v566
    %v707 = vpack.c.b16 %v571, %v569
    %v708 = vpack.c.b16 %v572, %v570
    %v709 = vpack.c.b16 %v575, %v573
    %v710 = vpack.c.b16 %v576, %v574
    %v711 = vpack.c.b16 %v579, %v577
    %v712 = vpack.c.b16 %v580, %v578
    %v713 = vpack.c.b16 %v583, %v581
    %v714 = vpack.c.b16 %v584, %v582
    %v715 = vpack.c.b16 %v587, %v585
    %v716 = vpack.c.b16 %v588, %v586
    %845 = vmatprep.subr.bf16.mxu0 %v590
    %846 = vmatpush1.bf16.msra.mxu0 %v589
    %847 = vmatprep.subr.bf16.mxu0 %v592
    %848 = vmatpush1.bf16.msra.mxu0 %v591
    %849 = vmatprep.subr.bf16.mxu0 %v594
    %850 = vmatpush1.bf16.msra.mxu0 %v593
    %851 = vmatprep.subr.bf16.mxu0 %v596
    %852 = vmatpush1.bf16.msra.mxu0 %v595
    %853 = vmatprep.subr.bf16.mxu0 %v598
    %854 = vmatpush1.bf16.msra.mxu0 %v597
    %855 = vmatprep.subr.bf16.mxu0 %v600
    %856 = vmatpush1.bf16.msra.mxu0 %v599
    %857 = vmatprep.subr.bf16.mxu0 %v602
    %858 = vmatpush1.bf16.msra.mxu0 %v601
    %859 = vmatprep.subr.bf16.mxu0 %v604
    %860 = vmatpush1.bf16.msra.mxu0 %v603
    %861 = vmatprep.subr.bf16.mxu0 %v606
    %862 = vmatpush1.bf16.msra.mxu0 %v605
    %863 = vmatprep.subr.bf16.mxu0 %v608
    %864 = vmatpush1.bf16.msra.mxu0 %v607
    %865 = vmatprep.subr.bf16.mxu0 %v610
    %866 = vmatpush1.bf16.msra.mxu0 %v609
    %867 = vmatprep.subr.bf16.mxu0 %v612
    %868 = vmatpush1.bf16.msra.mxu0 %v611
    %869 = vmatprep.subr.bf16.mxu0 %v614
    %870 = vmatpush1.bf16.msra.mxu0 %v613
    %871 = vmatprep.subr.bf16.mxu0 %v616
    %872 = vmatpush1.bf16.msra.mxu0 %v615
    %873 = vmatprep.subr.bf16.mxu0 %v618
    %874 = vmatpush1.bf16.msra.mxu0 %v617
    %875 = vmatprep.subr.bf16.mxu0 %v620
    %876 = vmatpush1.bf16.msra.mxu0 %v619
    %877 = vmatprep.mubr.bf16.mxu0 %v70
    %878 = vmatmul.mubr.bf16.gmra.mrb[0].mxu0 %v69
    %v879 = vpop.f32.mrb[0].mxu0
    %v880 = vadd.f32 0.0, %v879
    %v881 = vpop.f32.mrb[0].mxu0
    %v882 = vadd.f32 0.0, %v881
    %v883 = vpop.f32.mrb[0].mxu0
    %v884 = vpop.f32.mrb[0].mxu0
    %885 = vdwg.mxu0
    %886 = vmatprep.subr.bf16.mxu0 %v622
    %887 = vmatpush1.bf16.msra.mxu0 %v621
    %888 = vmatprep.subr.bf16.mxu0 %v624
    %889 = vmatpush1.bf16.msra.mxu0 %v623
    %890 = vmatprep.subr.bf16.mxu0 %v626
    %891 = vmatpush1.bf16.msra.mxu0 %v625
    %892 = vmatprep.subr.bf16.mxu0 %v628
    %893 = vmatpush1.bf16.msra.mxu0 %v627
    %894 = vmatprep.subr.bf16.mxu0 %v630
    %895 = vmatpush1.bf16.msra.mxu0 %v629
    %896 = vmatprep.subr.bf16.mxu0 %v632
    %897 = vmatpush1.bf16.msra.mxu0 %v631
    %898 = vmatprep.subr.bf16.mxu0 %v634
    %899 = vmatpush1.bf16.msra.mxu0 %v633
    %900 = vmatprep.subr.bf16.mxu0 %v636
    %901 = vmatpush1.bf16.msra.mxu0 %v635
    %902 = vmatprep.subr.bf16.mxu0 %v638
    %903 = vmatpush1.bf16.msra.mxu0 %v637
    %904 = vmatprep.subr.bf16.mxu0 %v640
    %905 = vmatpush1.bf16.msra.mxu0 %v639
    %906 = vmatprep.subr.bf16.mxu0 %v642
    %907 = vmatpush1.bf16.msra.mxu0 %v641
    %908 = vmatprep.subr.bf16.mxu0 %v644
    %909 = vmatpush1.bf16.msra.mxu0 %v643
    %910 = vmatprep.subr.bf16.mxu0 %v646
    %911 = vmatpush1.bf16.msra.mxu0 %v645
    %912 = vmatprep.subr.bf16.mxu0 %v648
    %913 = vmatpush1.bf16.msra.mxu0 %v647
    %914 = vmatprep.subr.bf16.mxu0 %v650
    %915 = vmatpush1.bf16.msra.mxu0 %v649
    %916 = vmatprep.subr.bf16.mxu0 %v652
    %917 = vmatpush1.bf16.msra.mxu0 %v651
    %918 = vmatprep.mubr.bf16.mxu0 %v72
    %919 = vmatmul.mubr.bf16.gmra.mrb[0].mxu0 %v71
    %v920 = vpop.f32.mrb[0].mxu0
    %v921 = vadd.f32 %v880, %v920
    %v922 = vpop.f32.mrb[0].mxu0
    %v923 = vadd.f32 %v882, %v922
    %v924 = vpop.f32.mrb[0].mxu0
    %v925 = vpop.f32.mrb[0].mxu0
    %926 = vdwg.mxu0
    %927 = vmatprep.subr.bf16.mxu0 %v654
    %928 = vmatpush1.bf16.msra.mxu0 %v653
    %929 = vmatprep.subr.bf16.mxu0 %v656
    %930 = vmatpush1.bf16.msra.mxu0 %v655
    %931 = vmatprep.subr.bf16.mxu0 %v658
    %932 = vmatpush1.bf16.msra.mxu0 %v657
    %933 = vmatprep.subr.bf16.mxu0 %v660
    %934 = vmatpush1.bf16.msra.mxu0 %v659
    %935 = vmatprep.subr.bf16.mxu0 %v662
    %936 = vmatpush1.bf16.msra.mxu0 %v661
    %937 = vmatprep.subr.bf16.mxu0 %v664
    %938 = vmatpush1.bf16.msra.mxu0 %v663
    %939 = vmatprep.subr.bf16.mxu0 %v666
    %940 = vmatpush1.bf16.msra.mxu0 %v665
    %941 = vmatprep.subr.bf16.mxu0 %v668
    %942 = vmatpush1.bf16.msra.mxu0 %v667
    %943 = vmatprep.subr.bf16.mxu0 %v670
    %944 = vmatpush1.bf16.msra.mxu0 %v669
    %945 = vmatprep.subr.bf16.mxu0 %v672
    %946 = vmatpush1.bf16.msra.mxu0 %v671
    %947 = vmatprep.subr.bf16.mxu0 %v674
    %948 = vmatpush1.bf16.msra.mxu0 %v673
    %949 = vmatprep.subr.bf16.mxu0 %v676
    %950 = vmatpush1.bf16.msra.mxu0 %v675
    %951 = vmatprep.subr.bf16.mxu0 %v678
    %952 = vmatpush1.bf16.msra.mxu0 %v677
    %953 = vmatprep.subr.bf16.mxu0 %v680
    %954 = vmatpush1.bf16.msra.mxu0 %v679
    %955 = vmatprep.subr.bf16.mxu0 %v682
    %956 = vmatpush1.bf16.msra.mxu0 %v681
    %957 = vmatprep.subr.bf16.mxu0 %v684
    %958 = vmatpush1.bf16.msra.mxu0 %v683
    %959 = vmatprep.mubr.bf16.mxu0 %v74
    %960 = vmatmul.mubr.bf16.gmra.mrb[0].mxu0 %v73
    %v961 = vpop.f32.mrb[0].mxu0
    %v962 = vadd.f32 %v921, %v961
    %v963 = vpop.f32.mrb[0].mxu0
    %v964 = vadd.f32 %v923, %v963
    %v965 = vpop.f32.mrb[0].mxu0
    %v966 = vpop.f32.mrb[0].mxu0
    %967 = vdwg.mxu0
    %968 = vmatprep.subr.bf16.mxu0 %v686
    %969 = vmatpush1.bf16.msra.mxu0 %v685
    %970 = vmatprep.subr.bf16.mxu0 %v688
    %971 = vmatpush1.bf16.msra.mxu0 %v687
    %972 = vmatprep.subr.bf16.mxu0 %v690
    %973 = vmatpush1.bf16.msra.mxu0 %v689
    %974 = vmatprep.subr.bf16.mxu0 %v692
    %975 = vmatpush1.bf16.msra.mxu0 %v691
    %976 = vmatprep.subr.bf16.mxu0 %v694
    %977 = vmatpush1.bf16.msra.mxu0 %v693
    %978 = vmatprep.subr.bf16.mxu0 %v696
    %979 = vmatpush1.bf16.msra.mxu0 %v695
    %980 = vmatprep.subr.bf16.mxu0 %v698
    %981 = vmatpush1.bf16.msra.mxu0 %v697
    %982 = vmatprep.subr.bf16.mxu0 %v700
    %983 = vmatpush1.bf16.msra.mxu0 %v699
    %984 = vmatprep.subr.bf16.mxu0 %v702
    %985 = vmatpush1.bf16.msra.mxu0 %v701
    %986 = vmatprep.subr.bf16.mxu0 %v704
    %987 = vmatpush1.bf16.msra.mxu0 %v703
    %988 = vmatprep.subr.bf16.mxu0 %v706
    %989 = vmatpush1.bf16.msra.mxu0 %v705
    %990 = vmatprep.subr.bf16.mxu0 %v708
    %991 = vmatpush1.bf16.msra.mxu0 %v707
    %992 = vmatprep.subr.bf16.mxu0 %v710
    %993 = vmatpush1.bf16.msra.mxu0 %v709
    %994 = vmatprep.subr.bf16.mxu0 %v712
    %995 = vmatpush1.bf16.msra.mxu0 %v711
    %996 = vmatprep.subr.bf16.mxu0 %v714
    %997 = vmatpush1.bf16.msra.mxu0 %v713
    %998 = vmatprep.subr.bf16.mxu0 %v716
    %999 = vmatpush1.bf16.msra.mxu0 %v715
    %1000 = vmatprep.mubr.bf16.mxu0 %v76
    %1001 = vmatmul.mubr.bf16.gmra.mrb[0].mxu0 %v75
    %v1002 = vpop.f32.mrb[0].mxu0
    %v1003 = vadd.f32 %v962, %v1002
    %v1004 = vpop.f32.mrb[0].mxu0
    %v1005 = vadd.f32 %v964, %v1004
    %v1006 = vpop.f32.mrb[0].mxu0
    %v1007 = vpop.f32.mrb[0].mxu0
    %1008 = vdwg.mxu0
    %v1009 = vld [vmem:[%s2] sm:$0x1]
    %v1010 = vlaneseq
    %v1011 = vshrl.u32 %v1010, 7
    %v1012 = vsub.s32 0, %v1011
    %v1013 = vrot.slane %v1009, %v1012
    %v1014 = vadd.f32 %v1003, %v1013
    %v1015 = vmax.f32 %v1014, 0.0
    %s1016 = sld [smem:[#allocation2]]
    %v1017 = vstv %s1016
    %vm1018 = vcmp.gt.f32.partialorder %v1005, %v1017
    %v1019 = vpack.c.bf16 %v1015, %v1015
    %v1020 = vld [vmem:[%s3] sm:$0xf]
    %v1021 = vld [vmem:[%s3 + $0x4] sm:$0xf]
    %v1022 = vld [vmem:[%s3 + $0x8] sm:$0xf]
    %v1023 = vld [vmem:[%s3 + $0xc] sm:$0xf]
    %v1024 = vld [vmem:[%s3 + $0x10] sm:$0xf]
    %v1025 = vld [vmem:[%s3 + $0x14] sm:$0xf]
    %v1026 = vld [vmem:[%s3 + $0x18] sm:$0xf]
    %v1027 = vld [vmem:[%s3 + $0x1c] sm:$0xf]
    %v1028 = vld [vmem:[%s3 + $0x20] sm:$0xf]
    %v1029 = vld [vmem:[%s3 + $0x24] sm:$0xf]
    %v1030 = vld [vmem:[%s3 + $0x28] sm:$0xf]
    %v1031 = vld [vmem:[%s3 + $0x2c] sm:$0xf]
    %v1032 = vld [vmem:[%s3 + $0x30] sm:$0xf]
    %v1033 = vld [vmem:[%s3 + $0x34] sm:$0xf]
    %v1034 = vld [vmem:[%s3 + $0x38] sm:$0xf]
    %v1035 = vld [vmem:[%s3 + $0x3c] sm:$0xf]
    %v1036 = vld [vmem:[%s2 + $0x1] sm:$0x1]
    %v1037 = vlaneseq
    %v1038 = vshrl.u32 %v1037, 7
    %v1039 = vsub.s32 0, %v1038
    %v1040 = vrot.slane %v1036, %v1039
    %v1057 = vunpack.c.l.b16 %v1020
    %v1058 = vunpack.c.l.b16 %v1021
    %v1059 = vunpack.c.l.b16 %v1022
    %v1060 = vunpack.c.l.b16 %v1023
    %v1061 = vunpack.c.l.b16 %v1024
    %v1062 = vunpack.c.l.b16 %v1025
    %v1063 = vunpack.c.l.b16 %v1026
    %v1064 = vunpack.c.l.b16 %v1027
    %v1065 = vunpack.c.l.b16 %v1028
    %v1066 = vunpack.c.l.b16 %v1029
    %v1067 = vunpack.c.l.b16 %v1030
    %v1068 = vunpack.c.l.b16 %v1031
    %v1069 = vunpack.c.l.b16 %v1032
    %v1070 = vunpack.c.l.b16 %v1033
    %v1071 = vunpack.c.l.b16 %v1034
    %v1072 = vunpack.c.l.b16 %v1035
    %v1073 = vpack.c.b16 %v1058, %v1057
    %v1074 = vpack.c.b16 %v1060, %v1059
    %v1075 = vpack.c.b16 %v1062, %v1061
    %v1076 = vpack.c.b16 %v1064, %v1063
    %v1077 = vpack.c.b16 %v1066, %v1065
    %v1078 = vpack.c.b16 %v1068, %v1067
    %v1079 = vpack.c.b16 %v1070, %v1069
    %v1080 = vpack.c.b16 %v1072, %v1071
    %1089 = vmatprep.subr.bf16.mxu0 0
    %1090 = vmatpush1.bf16.msra.mxu0 %v1073
    %1091 = vmatprep.subr.bf16.mxu0 0
    %1092 = vmatpush1.bf16.msra.mxu0 %v1074
    %1093 = vmatprep.subr.bf16.mxu0 0
    %1094 = vmatpush1.bf16.msra.mxu0 %v1075
    %1095 = vmatprep.subr.bf16.mxu0 0
    %1096 = vmatpush1.bf16.msra.mxu0 %v1076
    %1097 = vmatprep.subr.bf16.mxu0 0
    %1098 = vmatpush1.bf16.msra.mxu0 %v1077
    %1099 = vmatprep.subr.bf16.mxu0 0
    %1100 = vmatpush1.bf16.msra.mxu0 %v1078
    %1101 = vmatprep.subr.bf16.mxu0 0
    %1102 = vmatpush1.bf16.msra.mxu0 %v1079
    %1103 = vmatprep.subr.bf16.mxu0 0
    %1104 = vmatpush1.bf16.msra.mxu0 %v1080
    %1105 = vmatprep.subr.bf16.mxu0 0
    %1106 = vmatpush1.bf16.msra.mxu0 0
    %1107 = vmatprep.subr.bf16.mxu0 0
    %1108 = vmatpush1.bf16.msra.mxu0 0
    %1109 = vmatprep.subr.bf16.mxu0 0
    %1110 = vmatpush1.bf16.msra.mxu0 0
    %1111 = vmatprep.subr.bf16.mxu0 0
    %1112 = vmatpush1.bf16.msra.mxu0 0
    %1113 = vmatprep.subr.bf16.mxu0 0
    %1114 = vmatpush1.bf16.msra.mxu0 0
    %1115 = vmatprep.subr.bf16.mxu0 0
    %1116 = vmatpush1.bf16.msra.mxu0 0
    %1117 = vmatprep.subr.bf16.mxu0 0
    %1118 = vmatpush1.bf16.msra.mxu0 0
    %1119 = vmatprep.subr.bf16.mxu0 0
    %1120 = vmatpush1.bf16.msra.mxu0 0
    %1121 = vmatprep.mubr.bf16.mxu0 0
    %1122 = vmatmul.mubr.bf16.gmra.mrb[0].mxu0 %v1019
    %v1123 = vpop.f32.mrb[0].mxu0
    %v1124 = vadd.f32 %v1040, %v1123
    %v1125 = vpop.f32.mrb[0].mxu0
    %v1126 = vpop.f32.mrb[0].mxu0
    %v1127 = vpop.f32.mrb[0].mxu0
    %1128 = vdwg.mxu0
    %v1129 = vsel %vm1018, 1, 0
    %1130 = vset.pattern.permute.xlu0 0
    %1131 = vperm.xlu0 %1130, %v1129
    %v1132 = vpop.permute.xlu0 %1131
    %vm1133 = vcmp.eq.s32.totalorder %v1132, 1
    %v1134 = vsel %vm1133, %v1124, 0.0
    %vm1135 = vcmask 9216
    %1136 = vst.msk [vmem:[#allocation3] sm:$0x3] %vm1135, %v1134
    // Predicated region
    $region22: #{tpu_custom_call.1} parent=1 // pred_check
      _
    $region23: #{tpu_custom_call.1} parent=1 // pred_check_branch
      %1138 = sbr.rel (0) target = $region25
    $region24: #{tpu_custom_call.1} parent=1 // pred_region
      %s1140 = ssub.s32 32, 32
      %1141 = vsyncadd [#allocation4], %s1140
      %s1143 = sshll.u32 [#allocation3], 4
      %s1144 = int_to_ptr.vmem [resolvable:$true] %s1143
      %1146 = dma.vmem_to_hbm [thread:$0]  %s1144, 32, %s5, [#allocation4]
    $region25: #{tpu_custom_call.1} parent=1 // pred_fallthru
      _
    // Predicated region
    $region26: #{tpu_custom_call.1} parent=1 // pred_check
      _
    $region27: #{tpu_custom_call.1} parent=1 // pred_check_branch
      %1148 = sbr.rel (0) target = $region29
    $region28: #{tpu_custom_call.1} parent=1 // pred_region
      %1149 = dma.done [#allocation4], 32
    $region29: #{tpu_custom_call.1} parent=1 // pred_fallthru
      _
    %1150 = vsyncpa [#allocation4], 1

</llo_original>
